<compile_context>
chip_gen: v6e
topology: v6e:2x2x1
jax: 0.10.0
libtpu: 0.0.40
codegen_flags: <defaults>
</compile_context>

<pallas_src>
import jax
import jax.numpy as jnp
import numpy as np
from jax import lax
from jax.experimental import pallas as pl
from jax.experimental.pallas import tpu as pltpu


def _round_up(x, m):
    return ((x + m - 1) // m) * m


def _round_down(x, m):
    return (x // m) * m


_MIN_TILE_B = 8
_MAX_TILE_B = 1024


# --------------------------------------------------------------------------- #
# Kernels
# --------------------------------------------------------------------------- #
def _fused_kernel(x_ref, wt_ref, b_ref, o_ref):
    """Resident-weight path: one grid step per batch tile, no K axis."""
    # ReLU in f32 (VPU), bf16 operands into the MXU, f32 accumulation.
    x = jnp.maximum(x_ref[...], 0.0).astype(jnp.bfloat16)
    w = wt_ref[...].astype(jnp.bfloat16)
    y = jnp.dot(x, w, preferred_element_type=jnp.float32) + b_ref[...]
    # Matches torch: x / x.pow(2).sum(1, keepdim=True).sqrt()
    # (no epsilon in the original; an all-zero row would be NaN there too).
    # Padded output columns carry zero weight + zero bias, so they add 0 here.
    inv = lax.rsqrt(jnp.sum(y * y, axis=-1, keepdims=True))  # single EUP op
    o_ref[...] = y * inv


def _ktiled_kernel(x_ref, wt_ref, b_ref, o_ref):
    """Fallback when the full weight does not fit VMEM: accumulate over K
    directly into the resident f32 output block (no scratch accumulator)."""
    k = pl.program_id(1)

    @pl.when(k == 0)
    def _init():
        o_ref[...] = jnp.zeros_like(o_ref)

    x = jnp.maximum(x_ref[...], 0.0).astype(jnp.bfloat16)
    w = wt_ref[...].astype(jnp.bfloat16)
    o_ref[...] += jnp.dot(x, w, preferred_element_type=jnp.float32)

    @pl.when(k == pl.num_programs(1) - 1)
    def _finalize():
        y = o_ref[...] + b_ref[...]
        inv = lax.rsqrt(jnp.sum(y * y, axis=-1, keepdims=True))
        o_ref[...] = y * inv


# --------------------------------------------------------------------------- #
# Tile / VMEM sizing helpers
# --------------------------------------------------------------------------- #
def _vmem_budget_bytes():
    cap = 64 << 20  # conservative default = v7x per-TC VMEM
    try:
        cap = int(getattr(pltpu.get_tpu_info(), "vmem_capacity_bytes", cap))
    except Exception:
        pass
    # ~25% headroom for compiler-internal scratch / semaphores:
    # -> ~48 MiB on v7x, ~96 MiB on v5e/v6e.
    return (cap * 3) // 4


def _pick_tile_b(B, bytes_per_row, avail_bytes):
    cap = max(_MIN_TILE_B, avail_bytes // max(bytes_per_row, 1))
    tile_b = min(_MAX_TILE_B, cap, _round_up(B, _MIN_TILE_B))
    if tile_b >= 256:
        tile_b = _round_down(tile_b, 256)          # v6e/v7x 256-wide MXU
    else:
        tile_b = max(_MIN_TILE_B, _round_down(tile_b, _MIN_TILE_B))
    # Give both v7x TensorCores a batch tile whenever there is enough work.
    if pl.cdiv(B, tile_b) < 2 and B > _MIN_TILE_B:
        tile_b = max(_MIN_TILE_B, _round_up(pl.cdiv(B, 2), _MIN_TILE_B))
    return tile_b


# --------------------------------------------------------------------------- #
# Params (one-time, off the forward path)
# --------------------------------------------------------------------------- #
def make_params(dim, embedding_size, key):
    """Mirror the PyTorch init with torch's Linear layout (weight [E, D], f32):
    kaiming_uniform_(mode='fan_in', nonlinearity='relu') for the weight and the
    default Linear bias init U(-1/sqrt(fan_in), 1/sqrt(fan_in))."""
    kw, kb = jax.random.split(key)
    fan_in = dim
    bound_w = float(np.sqrt(2.0) * np.sqrt(3.0 / fan_in))
    w = jax.random.uniform(kw, (embedding_size, dim), jnp.float32,
                           minval=-bound_w, maxval=bound_w)
    bound_b = float(1.0 / np.sqrt(fan_in))
    b = jax.random.uniform(kb, (embedding_size,), jnp.float32,
                           minval=-bound_b, maxval=bound_b)
    return w, b


def prepare_params(w, b, *, d_align=128, e_align=256):
    """One-time layout prep: transpose the torch-layout [E, D] weight to [D, E]
    and zero-pad to hardware-friendly [D_pad, E_pad] (E_pad multiple of 256 for
    lane-dense stores / full MXU width). Kept in f32 for parity with the torch
    module; the kernel casts to bf16 per tile on the way into the MXU."""
    E, D = w.shape
    assert b.shape == (E,)
    D_pad = _round_up(D, d_align)
    E_pad = _round_up(E, e_align)
    wt_pad = jnp.zeros((D_pad, E_pad), jnp.float32).at[:D, :E].set(w.T)
    b_pad = jnp.zeros((1, E_pad), jnp.float32).at[0, :E].set(b)
    return wt_pad, b_pad


# --------------------------------------------------------------------------- #
# Forward
# --------------------------------------------------------------------------- #
def img_encoder_forward(x, wt_pad, b_pad, out_features, *, tile_b=None):
    """x: [B, D] f32; wt_pad: [D_pad, E_pad] f32 (pre-transposed, zero-padded);
    b_pad: [1, E_pad] f32 (zero-padded). Returns [B, out_features] f32."""
    B, D = x.shape
    D_pad, E_pad = wt_pad.shape
    assert b_pad.shape == (1, E_pad) and D <= D_pad and out_features <= E_pad

    # Pad activation columns only when D is misaligned (zero x-columns meet
    # zero weight rows -> exact). Batch raggedness is handled by the grid
    # (pl.cdiv) -- no padded copy of the dominant HBM stream.
    if D != D_pad:
        x = jnp.pad(x, ((0, 0), (0, D_pad - D)))

    budget = _vmem_budget_bytes()
    bias_bytes = 2 * E_pad * 4
    wt_res_bytes = 2 * D_pad * E_pad * 4            # count double-buffered (safe)
    row_bytes_res = 2 * D_pad * 4 + 2 * E_pad * 4   # x + out tiles, per batch row

    cost = pl.CostEstimate(
        flops=int(2 * B * D_pad * E_pad + 4 * B * E_pad),
        transcendentals=int(B),
        bytes_accessed=int(x.size * 4 + wt_pad.size * 4 + b_pad.size * 4
                           + B * E_pad * 4),
    )

    resident = (wt_res_bytes + bias_bytes + _MIN_TILE_B * row_bytes_res) <= budget

    if resident:
        # Full weight stays in VMEM (constant block index -> DMA'd once);
        # single grid axis over the batch, no accumulator machinery.
        if tile_b is None:
            tile_b = _pick_tile_b(B, row_bytes_res,
                                  budget - wt_res_bytes - bias_bytes)
        grid = (pl.cdiv(B, tile_b),)
        out = pl.pallas_call(
            _fused_kernel,
            out_shape=jax.ShapeDtypeStruct((B, E_pad), jnp.float32),
            grid_spec=pltpu.PrefetchScalarGridSpec(
                num_scalar_prefetch=0,
                grid=grid,
                in_specs=[
                    pl.BlockSpec((tile_b, D_pad), lambda i: (i, 0)),  # x tile
                    pl.BlockSpec((D_pad, E_pad), lambda i: (0, 0)),   # resident W
                    pl.BlockSpec((1, E_pad), lambda i: (0, 0)),       # bias
                ],
                out_specs=pl.BlockSpec((tile_b, E_pad), lambda i: (i, 0)),
            ),
            compiler_params=pltpu.CompilerParams(
                dimension_semantics=("parallel",),
                vmem_limit_bytes=int(budget),
            ),
            cost_estimate=cost,
        )(x, wt_pad, b_pad)
    else:
        # K-tiled fallback for weights too large to keep resident
        # (e.g. v7x's 64 MiB per-TC VMEM with a very large dim*embedding).
        tile_d = 128
        for cand in (2048, 1024, 512, 256, 128):
            need = (2 * cand * E_pad * 4 + bias_bytes
                    + _MIN_TILE_B * (2 * cand * 4 + 2 * E_pad * 4))
            if D_pad % cand == 0 and need <= budget:
                tile_d = cand
                break
        row_bytes = 2 * tile_d * 4 + 2 * E_pad * 4
        if tile_b is None:
            tile_b = _pick_tile_b(B, row_bytes,
                                  budget - 2 * tile_d * E_pad * 4 - bias_bytes)
        grid = (pl.cdiv(B, tile_b), D_pad // tile_d)
        out = pl.pallas_call(
            _ktiled_kernel,
            out_shape=jax.ShapeDtypeStruct((B, E_pad), jnp.float32),
            grid_spec=pltpu.PrefetchScalarGridSpec(
                num_scalar_prefetch=0,
                grid=grid,
                in_specs=[
                    pl.BlockSpec((tile_b, tile_d), lambda i, k: (i, k)),  # x
                    pl.BlockSpec((tile_d, E_pad), lambda i, k: (k, 0)),   # W tile
                    pl.BlockSpec((1, E_pad), lambda i, k: (0, 0)),        # bias
                ],
                out_specs=pl.BlockSpec((tile_b, E_pad), lambda i, k: (i, 0)),
            ),
            compiler_params=pltpu.CompilerParams(
                dimension_semantics=("parallel", "arbitrary"),
                vmem_limit_bytes=int(budget),
            ),
            cost_estimate=cost,
        )(x, wt_pad, b_pad)

    return out[:, :out_features]


# --------------------------------------------------------------------------- #
# Reference & test
# --------------------------------------------------------------------------- #
def reference_forward(x, w, b):
    """Pure-JAX f32 reference of the PyTorch forward (torch layout [E, D])."""
    h = jnp.maximum(x, 0.0)
    y = h @ w.T + b
    return y / jnp.sqrt(jnp.sum(y * y, axis=1, keepdims=True))


if __name__ == "__main__":
    # Small shapes consistent with the module (dim -> embedding_size projection).
    # EMB is deliberately not a multiple of 256 to exercise the padded layout.
    B, DIM, EMB = 256, 512, 200

    key = jax.random.PRNGKey(0)
    kx, kp = jax.random.split(key)
    x = jax.random.normal(kx, (B, DIM), jnp.float32)

    w, b = make_params(DIM, EMB, kp)        # torch-layout f32 params
    wt_pad, b_pad = prepare_params(w, b)    # one-time layout prep (off fwd path)

    out = img_encoder_forward(x, wt_pad, b_pad, EMB)
    out = jax.block_until_ready(out)
    assert out.shape == (B, EMB)

    ref = reference_forward(x, w, b)
    # bf16 MXU operands (f32 accumulation) vs the pure-f32 reference.
    np.testing.assert_allclose(np.asarray(out), np.asarray(ref),
                               rtol=2e-2, atol=5e-3)

    print("KERNEL_OK")
</pallas_src>

<mosaic_0001>
module attributes {stable_mosaic.version = 11 : i64} {
  func.func @_fused_kernel(%arg0: i32, %arg1: memref<128x512xf32, #tpu.memory_space<vmem>>, %arg2: memref<512x256xf32, #tpu.memory_space<vmem>>, %arg3: memref<1x256xf32, #tpu.memory_space<vmem>>, %arg4: memref<128x256xf32, #tpu.memory_space<vmem>>) attributes {dimension_semantics = [#tpu.dimension_semantics<parallel>], iteration_bounds = array<i64: 2>, scalar_prefetch = 0 : i64, scratch_operands = 0 : i64, tpu.core_type = #tpu.core_type<tc>, window_params = [{transform_indices = @transform_0, window_bounds = array<i64: 128, 512>}, {pipeline_mode = #tpu.pipeline_mode<synchronous>, transform_indices = @transform_1, window_bounds = array<i64: 512, 256>}, {pipeline_mode = #tpu.pipeline_mode<synchronous>, transform_indices = @transform_2, window_bounds = array<i64: 1, 256>}, {transform_indices = @transform_3, window_bounds = array<i64: 128, 256>}]} {
    %c0 = arith.constant 0 : index
    %c0_0 = arith.constant 0 : index
    %0 = vector.load %arg1[%c0, %c0_0] : memref<128x512xf32, #tpu.memory_space<vmem>>, vector<128x512xf32>
    %cst = arith.constant 0.000000e+00 : f32
    %1 = vector.broadcast %cst : f32 to vector<128x512xf32>
    %2 = arith.maximumf %0, %1 : vector<128x512xf32>
    %3 = arith.truncf %2 : vector<128x512xf32> to vector<128x512xbf16>
    %c0_1 = arith.constant 0 : index
    %c0_2 = arith.constant 0 : index
    %4 = vector.load %arg2[%c0_1, %c0_2] : memref<512x256xf32, #tpu.memory_space<vmem>>, vector<512x256xf32>
    %5 = arith.truncf %4 : vector<512x256xf32> to vector<512x256xbf16>
    %cst_3 = arith.constant dense<0.000000e+00> : vector<128x256xf32>
    %6 = tpu.matmul %3, %5, %cst_3 {dimension_numbers = #tpu.dot_dimension_numbers<[1], [0], [0], [1], [0, 0, 1, 1], [], []>} : vector<128x512xbf16>, vector<512x256xbf16>, vector<128x256xf32> -> vector<128x256xf32>
    %c0_4 = arith.constant 0 : index
    %c0_5 = arith.constant 0 : index
    %7 = vector.load %arg3[%c0_4, %c0_5] : memref<1x256xf32, #tpu.memory_space<vmem>>, vector<1x256xf32>
    %8 = vector.broadcast %7 : vector<1x256xf32> to vector<128x256xf32>
    %9 = arith.addf %6, %8 : vector<128x256xf32>
    %10 = arith.mulf %9, %9 : vector<128x256xf32>
    %cst_6 = arith.constant dense<0.000000e+00> : vector<128xf32>
    %11 = vector.multi_reduction <add>, %10, %cst_6 [1] : vector<128x256xf32> to vector<128xf32>
    %12 = vector.shape_cast %11 : vector<128xf32> to vector<128x1xf32>
    %13 = math.rsqrt %12 : vector<128x1xf32>
    %14 = vector.broadcast %13 : vector<128x1xf32> to vector<128x256xf32>
    %15 = arith.mulf %9, %14 : vector<128x256xf32>
    %c0_7 = arith.constant 0 : index
    %c0_8 = arith.constant 0 : index
    %16 = vector.load %arg4[%c0_7, %c0_8] : memref<128x256xf32, #tpu.memory_space<vmem>>, vector<128x256xf32>
    tpu.vector_store %arg4[%c0_7, %c0_8], %15 {strides = array<i32>} : memref<128x256xf32, #tpu.memory_space<vmem>>, vector<128x256xf32>,
    return
  }
  func.func @transform_0(%arg0: i32) -> (i32, i32) {
    %c0_i32 = arith.constant 0 : i32
    %c0_i32_0 = arith.constant 0 : i32
    return %arg0, %c0_i32 : i32, i32
  }
  func.func @transform_1(%arg0: i32) -> (i32, i32) {
    %c0_i32 = arith.constant 0 : i32
    %c0_i32_0 = arith.constant 0 : i32
    %c0_i32_1 = arith.constant 0 : i32
    return %c0_i32, %c0_i32_0 : i32, i32
  }
  func.func @transform_2(%arg0: i32) -> (i32, i32) {
    %c0_i32 = arith.constant 0 : i32
    %c0_i32_0 = arith.constant 0 : i32
    %c0_i32_1 = arith.constant 0 : i32
    return %c0_i32, %c0_i32_0 : i32, i32
  }
  func.func @transform_3(%arg0: i32) -> (i32, i32) {
    %c0_i32 = arith.constant 0 : i32
    %c0_i32_0 = arith.constant 0 : i32
    return %arg0, %c0_i32 : i32, i32
  }
}

</mosaic_0001>

<llo_original>
// kernel: tpu_custom_call.1
$region0: #{tpu_custom_call.1}
  #allocation0 [shape = 'u32[]', space=smem, size = 0x4, offset = 0x4, fixed_abs, tag = 'smem constant byte address 0x4 - core index']
  #allocation1 [shape = 'u32[144,128]{1,0:T(1,128)}', space=vmem, size = 0x12000, scoped, tag = 'internal scratch']
  %s0 = inlined_call_operand.hbm [shape: f32[256,512], index: 0, kind: input, shape index: {}]
  %s1 = inlined_call_operand.hbm [shape: f32[512,256], index: 1, kind: input, shape index: {}]
  %s2 = inlined_call_operand.vmem [shape: f32[1,256], index: 2, kind: input, shape index: {}]
  %s3 = inlined_call_operand.hbm [shape: f32[256,256], index: 3, kind: output, shape index: {}]
  %s4 = sld [smem:[#allocation0]]
  $region53: #{tpu_custom_call.1} parent=0
    _
  %s6 = ssub.s32 1, %s4
  %s7 = scalar_select 0, %s6, %s4
  $region1: #{tpu_custom_call.1} parent=0
    #allocation2 [shape = 'u8[524288]{0}', space=vmem, size = 0x80000, scoped, tag = 'input window, operand 0']
    #allocation3 [shape = 's32[2]{0}', space=sflag, size = 0x8, scoped, tag = 'scoped memory for tpu_custom_call.1']
    #allocation4 [shape = 's32[2]{0}', space=sflag, size = 0x8, scoped, tag = 'scoped memory for tpu_custom_call.1']
    #allocation5 [shape = 'u8[524288]{0}', space=vmem, size = 0x80000, scoped, tag = 'input window, operand 1, single buffered']
    #allocation6 [shape = 's32[1]{0}', space=sflag, size = 0x4, scoped, tag = 'scoped memory for tpu_custom_call.1']
    #allocation7 [shape = 'u8[262144]{0}', space=vmem, size = 0x40000, scoped, tag = 'output window, operand 0']
    %8 = vsyncpa [#allocation3], 0
    %s9 = scalar_lea.sflag [#allocation3], 1
    %10 = vsyncpa %s9, 0
    %11 = vsyncpa [#allocation6], 0
    %12 = vsyncpa [#allocation4], 0
    %s13 = scalar_lea.sflag [#allocation4], 1
    %14 = vsyncpa %s13, 0
    loop: start=0, step=1, limit=4
    $region2: #{tpu_custom_call.1} parent=1 // loop_pre_header
      _
    $region3: #{tpu_custom_call.1} parent=1 // loop_header
      %s16 = sphi 0, %s20
      %p17 = scmp.ge.s32.totalorder %s16, 4
      %s26 = sphi 0, %s28
      %s29 = sphi 0, %s26
      %s30 = sphi 0, %s29
      %s46 = sphi 0, %s30
      %s50 = sphi 0, %s50
      %s52 = sphi 0, %s50
      %s53 = sphi 0, %s52
      %s67 = sphi 0, %s53
      %s71 = sphi 0, %s71
      %s73 = sphi 0, %s71
      %s74 = sphi 0, %s73
      %s88 = sphi 0, %s74
      %s94 = sphi 0, %s96
      %s97 = sphi 0, %s94
      %s98 = sphi 0, %s97
      %s114 = sphi 0, %s98
    $region4: #{tpu_custom_call.1} parent=1 // loop_header_branch
      %19 = sbr.rel (%p17) target = $region8
    $region5: #{tpu_custom_call.1} parent=1 // loop_body
      %s21 = ssub.s32 %s16, 1
      %s22 = ssub.s32 %s16, 2
      %s23 = sadd.s32 %s16, 1
      %s24 = ssub.s32 %s16, %s23
      %p25 = scmp.eq.s32.totalorder %s24, 0
      %s27 = sadd.s32 %s26, 1
      %s28 = scalar_select %p25, %s26, %s27
      %p31 = pneg %p25
      %p32 = scmp.eq.s32.totalorder %s16, 1
      %p33 = por %p31, %p32
      %p34 = scmp.ne.s32.totalorder %s26, %s29
      %p35 = scmp.eq.s32.totalorder %s16, 0
      %p36 = por %p34, %p35
      %p37 = scmp.ne.s32.totalorder %s26, %s29
      %p38 = scmp.eq.s32.totalorder %s21, 1
      %p39 = por %p37, %p38
      %p40 = scmp.ne.s32.totalorder %s29, %s30
      %p41 = scmp.eq.s32.totalorder %s21, 0
      %p42 = por %p40, %p41
      %p43 = scmp.ne.s32.totalorder %s29, %s30
      %p44 = scmp.eq.s32.totalorder %s22, 1
      %p45 = por %p43, %p44
      %p47 = scmp.ne.s32.totalorder %s30, %s46
      %p48 = scmp.eq.s32.totalorder %s22, 0
      %p49 = por %p47, %p48
      %s51 = sadd.s32 %s50, 1
      %p54 = scmp.eq.s32.totalorder %s16, 1
      %p55 = scmp.ne.s32.totalorder %s50, %s52
      %p56 = scmp.eq.s32.totalorder %s16, 0
      %p57 = por %p55, %p56
      %p58 = scmp.ne.s32.totalorder %s50, %s52
      %p59 = scmp.eq.s32.totalorder %s21, 1
      %p60 = por %p58, %p59
      %p61 = scmp.ne.s32.totalorder %s52, %s53
      %p62 = scmp.eq.s32.totalorder %s21, 0
      %p63 = por %p61, %p62
      %p64 = scmp.ne.s32.totalorder %s52, %s53
      %p65 = scmp.eq.s32.totalorder %s22, 1
      %p66 = por %p64, %p65
      %p68 = scmp.ne.s32.totalorder %s53, %s67
      %p69 = scmp.eq.s32.totalorder %s22, 0
      %p70 = por %p68, %p69
      %s72 = sadd.s32 %s71, 1
      %p75 = scmp.eq.s32.totalorder %s16, 1
      %p76 = scmp.ne.s32.totalorder %s71, %s73
      %p77 = scmp.eq.s32.totalorder %s16, 0
      %p78 = por %p76, %p77
      %p79 = scmp.ne.s32.totalorder %s71, %s73
      %p80 = scmp.eq.s32.totalorder %s21, 1
      %p81 = por %p79, %p80
      %p82 = scmp.ne.s32.totalorder %s73, %s74
      %p83 = scmp.eq.s32.totalorder %s21, 0
      %p84 = por %p82, %p83
      %p85 = scmp.ne.s32.totalorder %s73, %s74
      %p86 = scmp.eq.s32.totalorder %s22, 1
      %p87 = por %p85, %p86
      %p89 = scmp.ne.s32.totalorder %s74, %s88
      %p90 = scmp.eq.s32.totalorder %s22, 0
      %p91 = por %p89, %p90
      %s92 = ssub.s32 %s16, %s23
      %p93 = scmp.eq.s32.totalorder %s92, 0
      %s95 = sadd.s32 %s94, 1
      %s96 = scalar_select %p93, %s94, %s95
      %p99 = pneg %p93
      %p100 = scmp.eq.s32.totalorder %s16, 1
      %p101 = por %p99, %p100
      %p102 = scmp.ne.s32.totalorder %s94, %s97
      %p103 = scmp.eq.s32.totalorder %s16, 0
      %p104 = por %p102, %p103
      %p105 = scmp.ne.s32.totalorder %s94, %s97
      %p106 = scmp.eq.s32.totalorder %s21, 1
      %p107 = por %p105, %p106
      %p108 = scmp.ne.s32.totalorder %s97, %s98
      %p109 = scmp.eq.s32.totalorder %s21, 0
      %p110 = por %p108, %p109
      %p111 = scmp.ne.s32.totalorder %s97, %s98
      %p112 = scmp.eq.s32.totalorder %s22, 1
      %p113 = por %p111, %p112
      %p115 = scmp.ne.s32.totalorder %s98, %s114
      %p116 = scmp.eq.s32.totalorder %s22, 0
      %p117 = por %p115, %p116
      %p118 = scmp.le.s32.totalorder 1, %s16
      %p119 = scmp.lt.s32.totalorder %s16, 3
      %p120 = pnand %p118, %p119
      %p121 = pneg %p120
      // Predicated region
      $region9: #{tpu_custom_call.1} parent=5 // pred_check
        _
      $region10: #{tpu_custom_call.1} parent=5 // pred_check_branch
        %123 = sbr.rel (%p120) target = $region12
      $region11: #{tpu_custom_call.1} parent=5 // pred_region
        %s124 = ssub.s32 %s16, 1
        // Predicated region
        $region13: #{tpu_custom_call.1} parent=11 // pred_check
          %p125 = pneg %p63
        $region14: #{tpu_custom_call.1} parent=11 // pred_check_branch
          %127 = sbr.rel (%p125) target = $region16
        $region15: #{tpu_custom_call.1} parent=11 // pred_region
          %s129 = ssub.s32 16384, 16384
          %130 = vsyncadd [#allocation6], %s129
          %s131 = sshll.u32 [#allocation5], 4
          %s132 = int_to_ptr.vmem [resolvable:$true] %s131
          %137 = dma.hbm_to_vmem [thread:$0]  %s1, 16384, %s132, [#allocation6], 256, 256, 16
        $region16: #{tpu_custom_call.1} parent=11 // pred_fallthru
          _
        // Predicated region
        $region17: #{tpu_custom_call.1} parent=11 // pred_check
          %p138 = pneg %p84
        $region18: #{tpu_custom_call.1} parent=11 // pred_check_branch
          %140 = sbr.rel (%p138) target = $region20
        $region19: #{tpu_custom_call.1} parent=11 // pred_region
          _
        $region20: #{tpu_custom_call.1} parent=11 // pred_fallthru
          _
      $region12: #{tpu_custom_call.1} parent=5 // pred_fallthru
        _
      %p141 = scmp.lt.s32.totalorder %s16, 2
      // Predicated region
      $region21: #{tpu_custom_call.1} parent=5 // pred_check
        %p142 = pneg %p141
      $region22: #{tpu_custom_call.1} parent=5 // pred_check_branch
        %144 = sbr.rel (%p142) target = $region24
      $region23: #{tpu_custom_call.1} parent=5 // pred_region
        // Predicated region
        $region25: #{tpu_custom_call.1} parent=23 // pred_check
          %p145 = pneg %p36
        $region26: #{tpu_custom_call.1} parent=23 // pred_check_branch
          %147 = sbr.rel (%p145) target = $region28
        $region27: #{tpu_custom_call.1} parent=23 // pred_region
          %s148 = sand.u32 %s26, 1
          %s149 = scalar_lea.sflag [#allocation3], %s148
          %s150 = sand.u32 %s26, 1
          %s151 = smul.addr %s150, 512
          %s152 = scalar_lea.vmem [#allocation2], %s151
          %s153 = smul.u32 16, %s16
          %s155 = ssub.s32 8192, 8192
          %156 = vsyncadd %s149, %s155
          %s157 = smul.addr %s153, 4
          %s158 = smul.addr %s157, 128
          %s159 = scalar_lea.hbm %s0, %s158
          %s160 = sshll.u32 %s152, 4
          %s161 = int_to_ptr.vmem [resolvable:$true] %s160
          %166 = dma.hbm_to_vmem [thread:$0]  %s159, 8192, %s161, %s149, 512, 512, 32
        $region28: #{tpu_custom_call.1} parent=23 // pred_fallthru
          _
      $region24: #{tpu_custom_call.1} parent=5 // pred_fallthru
        _
      %p167 = scmp.le.s32.totalorder 1, %s16
      %p168 = scmp.lt.s32.totalorder %s16, 3
      %p169 = pnand %p167, %p168
      %p170 = pneg %p169
      // Predicated region
      $region29: #{tpu_custom_call.1} parent=5 // pred_check
        _
      $region30: #{tpu_custom_call.1} parent=5 // pred_check_branch
        %172 = sbr.rel (%p169) target = $region32
      $region31: #{tpu_custom_call.1} parent=5 // pred_region
        %s173 = ssub.s32 %s16, 1
        %s174 = sand.u32 %s29, 1
        %s175 = scalar_lea.sflag [#allocation3], %s174
        %s176 = sand.u32 %s29, 1
        %s177 = smul.addr %s176, 512
        %s178 = scalar_lea.vmem [#allocation2], %s177
        // Predicated region
        $region33: #{tpu_custom_call.1} parent=31 // pred_check
          %p179 = pneg %p42
        $region34: #{tpu_custom_call.1} parent=31 // pred_check_branch
          %181 = sbr.rel (%p179) target = $region36
        $region35: #{tpu_custom_call.1} parent=31 // pred_region
          %182 = dma.done %s175, 8192
        $region36: #{tpu_custom_call.1} parent=31 // pred_fallthru
          _
        // Predicated region
        $region37: #{tpu_custom_call.1} parent=31 // pred_check
          %p183 = pneg %p63
        $region38: #{tpu_custom_call.1} parent=31 // pred_check_branch
          %185 = sbr.rel (%p183) target = $region40
        $region39: #{tpu_custom_call.1} parent=31 // pred_region
          %186 = dma.done [#allocation6], 16384
        $region40: #{tpu_custom_call.1} parent=31 // pred_fallthru
          _
        %s187 = sand.u32 %s29, 1
        %s188 = scalar_lea.sflag [#allocation3], %s187
        %s189 = sand.u32 %s29, 1
        %s190 = smul.addr %s189, 512
        %s191 = scalar_lea.vmem [#allocation2], %s190
        %p192 = pneg %p42
        %p193 = pneg %p39
        %p194 = pneg %p63
        %p195 = pneg %p60
        %p196 = pneg %p84
        %p197 = pneg %p81
        %p198 = pneg %p110
        %p199 = pneg %p107
        %s200 = sand.u32 %s97, 1
        %s201 = scalar_lea.sflag [#allocation4], %s200
        %s202 = sand.u32 %s97, 1
        %s203 = smul.addr %s202, 256
        %s204 = scalar_lea.vmem [#allocation7], %s203
        %s205 = smul.u32 16, %s21
        %s206 = smul.u32 16, %s21
        %v207 = vld [vmem:[%s178] sm:$0xff]
        %v208 = vld [vmem:[%s178 + $0x8] sm:$0xff]
        %v209 = vld [vmem:[%s178 + $0x10] sm:$0xff]
        %v210 = vld [vmem:[%s178 + $0x18] sm:$0xff]
        %v211 = vld [vmem:[%s178 + $0x20] sm:$0xff]
        %v212 = vld [vmem:[%s178 + $0x28] sm:$0xff]
        %v213 = vld [vmem:[%s178 + $0x30] sm:$0xff]
        %v214 = vld [vmem:[%s178 + $0x38] sm:$0xff]
        %v215 = vld [vmem:[%s178 + $0x40] sm:$0xff]
        %v216 = vld [vmem:[%s178 + $0x48] sm:$0xff]
        %v217 = vld [vmem:[%s178 + $0x50] sm:$0xff]
        %v218 = vld [vmem:[%s178 + $0x58] sm:$0xff]
        %v219 = vld [vmem:[%s178 + $0x60] sm:$0xff]
        %v220 = vld [vmem:[%s178 + $0x68] sm:$0xff]
        %v221 = vld [vmem:[%s178 + $0x70] sm:$0xff]
        %v222 = vld [vmem:[%s178 + $0x78] sm:$0xff]
        %v223 = vld [vmem:[%s178 + $0x80] sm:$0xff]
        %v224 = vld [vmem:[%s178 + $0x88] sm:$0xff]
        %v225 = vld [vmem:[%s178 + $0x90] sm:$0xff]
        %v226 = vld [vmem:[%s178 + $0x98] sm:$0xff]
        %v227 = vld [vmem:[%s178 + $0xa0] sm:$0xff]
        %v228 = vld [vmem:[%s178 + $0xa8] sm:$0xff]
        %v229 = vld [vmem:[%s178 + $0xb0] sm:$0xff]
        %v230 = vld [vmem:[%s178 + $0xb8] sm:$0xff]
        %v231 = vld [vmem:[%s178 + $0xc0] sm:$0xff]
        %v232 = vld [vmem:[%s178 + $0xc8] sm:$0xff]
        %v233 = vld [vmem:[%s178 + $0xd0] sm:$0xff]
        %v234 = vld [vmem:[%s178 + $0xd8] sm:$0xff]
        %v235 = vld [vmem:[%s178 + $0xe0] sm:$0xff]
        %v236 = vld [vmem:[%s178 + $0xe8] sm:$0xff]
        %v237 = vld [vmem:[%s178 + $0xf0] sm:$0xff]
        %v238 = vld [vmem:[%s178 + $0xf8] sm:$0xff]
        %v239 = vld [vmem:[%s178 + $0x100] sm:$0xff]
        %v240 = vld [vmem:[%s178 + $0x108] sm:$0xff]
        %v241 = vld [vmem:[%s178 + $0x110] sm:$0xff]
        %v242 = vld [vmem:[%s178 + $0x118] sm:$0xff]
        %v243 = vld [vmem:[%s178 + $0x120] sm:$0xff]
        %v244 = vld [vmem:[%s178 + $0x128] sm:$0xff]
        %v245 = vld [vmem:[%s178 + $0x130] sm:$0xff]
        %v246 = vld [vmem:[%s178 + $0x138] sm:$0xff]
        %v247 = vld [vmem:[%s178 + $0x140] sm:$0xff]
        %v248 = vld [vmem:[%s178 + $0x148] sm:$0xff]
        %v249 = vld [vmem:[%s178 + $0x150] sm:$0xff]
        %v250 = vld [vmem:[%s178 + $0x158] sm:$0xff]
        %v251 = vld [vmem:[%s178 + $0x160] sm:$0xff]
        %v252 = vld [vmem:[%s178 + $0x168] sm:$0xff]
        %v253 = vld [vmem:[%s178 + $0x170] sm:$0xff]
        %v254 = vld [vmem:[%s178 + $0x178] sm:$0xff]
        %v255 = vld [vmem:[%s178 + $0x180] sm:$0xff]
        %v256 = vld [vmem:[%s178 + $0x188] sm:$0xff]
        %v257 = vld [vmem:[%s178 + $0x190] sm:$0xff]
        %v258 = vld [vmem:[%s178 + $0x198] sm:$0xff]
        %v259 = vld [vmem:[%s178 + $0x1a0] sm:$0xff]
        %v260 = vld [vmem:[%s178 + $0x1a8] sm:$0xff]
        %v261 = vld [vmem:[%s178 + $0x1b0] sm:$0xff]
        %v262 = vld [vmem:[%s178 + $0x1b8] sm:$0xff]
        %v263 = vld [vmem:[%s178 + $0x1c0] sm:$0xff]
        %v264 = vld [vmem:[%s178 + $0x1c8] sm:$0xff]
        %v265 = vld [vmem:[%s178 + $0x1d0] sm:$0xff]
        %v266 = vld [vmem:[%s178 + $0x1d8] sm:$0xff]
        %v267 = vld [vmem:[%s178 + $0x1e0] sm:$0xff]
        %v268 = vld [vmem:[%s178 + $0x1e8] sm:$0xff]
        %v269 = vld [vmem:[%s178 + $0x1f0] sm:$0xff]
        %v270 = vld [vmem:[%s178 + $0x1f8] sm:$0xff]
        %v271 = vmax.f32 %v207, 0.0
        %v272 = vmax.f32 %v208, 0.0
        %v273 = vmax.f32 %v209, 0.0
        %v274 = vmax.f32 %v210, 0.0
        %v275 = vmax.f32 %v211, 0.0
        %v276 = vmax.f32 %v212, 0.0
        %v277 = vmax.f32 %v213, 0.0
        %v278 = vmax.f32 %v214, 0.0
        %v279 = vmax.f32 %v215, 0.0
        %v280 = vmax.f32 %v216, 0.0
        %v281 = vmax.f32 %v217, 0.0
        %v282 = vmax.f32 %v218, 0.0
        %v283 = vmax.f32 %v219, 0.0
        %v284 = vmax.f32 %v220, 0.0
        %v285 = vmax.f32 %v221, 0.0
        %v286 = vmax.f32 %v222, 0.0
        %v287 = vmax.f32 %v223, 0.0
        %v288 = vmax.f32 %v224, 0.0
        %v289 = vmax.f32 %v225, 0.0
        %v290 = vmax.f32 %v226, 0.0
        %v291 = vmax.f32 %v227, 0.0
        %v292 = vmax.f32 %v228, 0.0
        %v293 = vmax.f32 %v229, 0.0
        %v294 = vmax.f32 %v230, 0.0
        %v295 = vmax.f32 %v231, 0.0
        %v296 = vmax.f32 %v232, 0.0
        %v297 = vmax.f32 %v233, 0.0
        %v298 = vmax.f32 %v234, 0.0
        %v299 = vmax.f32 %v235, 0.0
        %v300 = vmax.f32 %v236, 0.0
        %v301 = vmax.f32 %v237, 0.0
        %v302 = vmax.f32 %v238, 0.0
        %v303 = vmax.f32 %v239, 0.0
        %v304 = vmax.f32 %v240, 0.0
        %v305 = vmax.f32 %v241, 0.0
        %v306 = vmax.f32 %v242, 0.0
        %v307 = vmax.f32 %v243, 0.0
        %v308 = vmax.f32 %v244, 0.0
        %v309 = vmax.f32 %v245, 0.0
        %v310 = vmax.f32 %v246, 0.0
        %v311 = vmax.f32 %v247, 0.0
        %v312 = vmax.f32 %v248, 0.0
        %v313 = vmax.f32 %v249, 0.0
        %v314 = vmax.f32 %v250, 0.0
        %v315 = vmax.f32 %v251, 0.0
        %v316 = vmax.f32 %v252, 0.0
        %v317 = vmax.f32 %v253, 0.0
        %v318 = vmax.f32 %v254, 0.0
        %v319 = vmax.f32 %v255, 0.0
        %v320 = vmax.f32 %v256, 0.0
        %v321 = vmax.f32 %v257, 0.0
        %v322 = vmax.f32 %v258, 0.0
        %v323 = vmax.f32 %v259, 0.0
        %v324 = vmax.f32 %v260, 0.0
        %v325 = vmax.f32 %v261, 0.0
        %v326 = vmax.f32 %v262, 0.0
        %v327 = vmax.f32 %v263, 0.0
        %v328 = vmax.f32 %v264, 0.0
        %v329 = vmax.f32 %v265, 0.0
        %v330 = vmax.f32 %v266, 0.0
        %v331 = vmax.f32 %v267, 0.0
        %v332 = vmax.f32 %v268, 0.0
        %v333 = vmax.f32 %v269, 0.0
        %v334 = vmax.f32 %v270, 0.0
        %v335 = vpack.c.bf16 %v275, %v271
        %v336 = vpack.c.bf16 %v276, %v272
        %v337 = vpack.c.bf16 %v277, %v273
        %v338 = vpack.c.bf16 %v278, %v274
        %v339 = vpack.c.bf16 %v283, %v279
        %v340 = vpack.c.bf16 %v284, %v280
        %v341 = vpack.c.bf16 %v285, %v281
        %v342 = vpack.c.bf16 %v286, %v282
        %v343 = vpack.c.bf16 %v291, %v287
        %v344 = vpack.c.bf16 %v292, %v288
        %v345 = vpack.c.bf16 %v293, %v289
        %v346 = vpack.c.bf16 %v294, %v290
        %v347 = vpack.c.bf16 %v299, %v295
        %v348 = vpack.c.bf16 %v300, %v296
        %v349 = vpack.c.bf16 %v301, %v297
        %v350 = vpack.c.bf16 %v302, %v298
        %v351 = vpack.c.bf16 %v307, %v303
        %v352 = vpack.c.bf16 %v308, %v304
        %v353 = vpack.c.bf16 %v309, %v305
        %v354 = vpack.c.bf16 %v310, %v306
        %v355 = vpack.c.bf16 %v315, %v311
        %v356 = vpack.c.bf16 %v316, %v312
        %v357 = vpack.c.bf16 %v317, %v313
        %v358 = vpack.c.bf16 %v318, %v314
        %v359 = vpack.c.bf16 %v323, %v319
        %v360 = vpack.c.bf16 %v324, %v320
        %v361 = vpack.c.bf16 %v325, %v321
        %v362 = vpack.c.bf16 %v326, %v322
        %v363 = vpack.c.bf16 %v331, %v327
        %v364 = vpack.c.bf16 %v332, %v328
        %v365 = vpack.c.bf16 %v333, %v329
        %v366 = vpack.c.bf16 %v334, %v330
        %v367 = vld [vmem:[#allocation5] sm:$0xff]
        %v368 = vld [vmem:[#allocation5 + $0x8] sm:$0xff]
        %v369 = vld [vmem:[#allocation5 + $0x10] sm:$0xff]
        %v370 = vld [vmem:[#allocation5 + $0x18] sm:$0xff]
        %v371 = vld [vmem:[#allocation5 + $0x20] sm:$0xff]
        %v372 = vld [vmem:[#allocation5 + $0x28] sm:$0xff]
        %v373 = vld [vmem:[#allocation5 + $0x30] sm:$0xff]
        %v374 = vld [vmem:[#allocation5 + $0x38] sm:$0xff]
        %v375 = vld [vmem:[#allocation5 + $0x40] sm:$0xff]
        %v376 = vld [vmem:[#allocation5 + $0x48] sm:$0xff]
        %v377 = vld [vmem:[#allocation5 + $0x50] sm:$0xff]
        %v378 = vld [vmem:[#allocation5 + $0x58] sm:$0xff]
        %v379 = vld [vmem:[#allocation5 + $0x60] sm:$0xff]
        %v380 = vld [vmem:[#allocation5 + $0x68] sm:$0xff]
        %v381 = vld [vmem:[#allocation5 + $0x70] sm:$0xff]
        %v382 = vld [vmem:[#allocation5 + $0x78] sm:$0xff]
        %v383 = vld [vmem:[#allocation5 + $0x80] sm:$0xff]
        %v384 = vld [vmem:[#allocation5 + $0x88] sm:$0xff]
        %v385 = vld [vmem:[#allocation5 + $0x90] sm:$0xff]
        %v386 = vld [vmem:[#allocation5 + $0x98] sm:$0xff]
        %v387 = vld [vmem:[#allocation5 + $0xa0] sm:$0xff]
        %v388 = vld [vmem:[#allocation5 + $0xa8] sm:$0xff]
        %v389 = vld [vmem:[#allocation5 + $0xb0] sm:$0xff]
        %v390 = vld [vmem:[#allocation5 + $0xb8] sm:$0xff]
        %v391 = vld [vmem:[#allocation5 + $0xc0] sm:$0xff]
        %v392 = vld [vmem:[#allocation5 + $0xc8] sm:$0xff]
        %v393 = vld [vmem:[#allocation5 + $0xd0] sm:$0xff]
        %v394 = vld [vmem:[#allocation5 + $0xd8] sm:$0xff]
        %v395 = vld [vmem:[#allocation5 + $0xe0] sm:$0xff]
        %v396 = vld [vmem:[#allocation5 + $0xe8] sm:$0xff]
        %v397 = vld [vmem:[#allocation5 + $0xf0] sm:$0xff]
        %v398 = vld [vmem:[#allocation5 + $0xf8] sm:$0xff]
        %v399 = vld [vmem:[#allocation5 + $0x100] sm:$0xff]
        %v400 = vld [vmem:[#allocation5 + $0x108] sm:$0xff]
        %v401 = vld [vmem:[#allocation5 + $0x110] sm:$0xff]
        %v402 = vld [vmem:[#allocation5 + $0x118] sm:$0xff]
        %v403 = vld [vmem:[#allocation5 + $0x120] sm:$0xff]
        %v404 = vld [vmem:[#allocation5 + $0x128] sm:$0xff]
        %v405 = vld [vmem:[#allocation5 + $0x130] sm:$0xff]
        %v406 = vld [vmem:[#allocation5 + $0x138] sm:$0xff]
        %v407 = vld [vmem:[#allocation5 + $0x140] sm:$0xff]
        %v408 = vld [vmem:[#allocation5 + $0x148] sm:$0xff]
        %v409 = vld [vmem:[#allocation5 + $0x150] sm:$0xff]
        %v410 = vld [vmem:[#allocation5 + $0x158] sm:$0xff]
        %v411 = vld [vmem:[#allocation5 + $0x160] sm:$0xff]
        %v412 = vld [vmem:[#allocation5 + $0x168] sm:$0xff]
        %v413 = vld [vmem:[#allocation5 + $0x170] sm:$0xff]
        %v414 = vld [vmem:[#allocation5 + $0x178] sm:$0xff]
        %v415 = vld [vmem:[#allocation5 + $0x180] sm:$0xff]
        %v416 = vld [vmem:[#allocation5 + $0x188] sm:$0xff]
        %v417 = vld [vmem:[#allocation5 + $0x190] sm:$0xff]
        %v418 = vld [vmem:[#allocation5 + $0x198] sm:$0xff]
        %v419 = vld [vmem:[#allocation5 + $0x1a0] sm:$0xff]
        %v420 = vld [vmem:[#allocation5 + $0x1a8] sm:$0xff]
        %v421 = vld [vmem:[#allocation5 + $0x1b0] sm:$0xff]
        %v422 = vld [vmem:[#allocation5 + $0x1b8] sm:$0xff]
        %v423 = vld [vmem:[#allocation5 + $0x1c0] sm:$0xff]
        %v424 = vld [vmem:[#allocation5 + $0x1c8] sm:$0xff]
        %v425 = vld [vmem:[#allocation5 + $0x1d0] sm:$0xff]
        %v426 = vld [vmem:[#allocation5 + $0x1d8] sm:$0xff]
        %v427 = vld [vmem:[#allocation5 + $0x1e0] sm:$0xff]
        %v428 = vld [vmem:[#allocation5 + $0x1e8] sm:$0xff]
        %v429 = vld [vmem:[#allocation5 + $0x1f0] sm:$0xff]
        %v430 = vld [vmem:[#allocation5 + $0x1f8] sm:$0xff]
        %v431 = vld [vmem:[#allocation5 + $0x200] sm:$0xff]
        %v432 = vld [vmem:[#allocation5 + $0x208] sm:$0xff]
        %v433 = vld [vmem:[#allocation5 + $0x210] sm:$0xff]
        %v434 = vld [vmem:[#allocation5 + $0x218] sm:$0xff]
        %v435 = vld [vmem:[#allocation5 + $0x220] sm:$0xff]
        %v436 = vld [vmem:[#allocation5 + $0x228] sm:$0xff]
        %v437 = vld [vmem:[#allocation5 + $0x230] sm:$0xff]
        %v438 = vld [vmem:[#allocation5 + $0x238] sm:$0xff]
        %v439 = vld [vmem:[#allocation5 + $0x240] sm:$0xff]
        %v440 = vld [vmem:[#allocation5 + $0x248] sm:$0xff]
        %v441 = vld [vmem:[#allocation5 + $0x250] sm:$0xff]
        %v442 = vld [vmem:[#allocation5 + $0x258] sm:$0xff]
        %v443 = vld [vmem:[#allocation5 + $0x260] sm:$0xff]
        %v444 = vld [vmem:[#allocation5 + $0x268] sm:$0xff]
        %v445 = vld [vmem:[#allocation5 + $0x270] sm:$0xff]
        %v446 = vld [vmem:[#allocation5 + $0x278] sm:$0xff]
        %v447 = vld [vmem:[#allocation5 + $0x280] sm:$0xff]
        %v448 = vld [vmem:[#allocation5 + $0x288] sm:$0xff]
        %v449 = vld [vmem:[#allocation5 + $0x290] sm:$0xff]
        %v450 = vld [vmem:[#allocation5 + $0x298] sm:$0xff]
        %v451 = vld [vmem:[#allocation5 + $0x2a0] sm:$0xff]
        %v452 = vld [vmem:[#allocation5 + $0x2a8] sm:$0xff]
        %v453 = vld [vmem:[#allocation5 + $0x2b0] sm:$0xff]
        %v454 = vld [vmem:[#allocation5 + $0x2b8] sm:$0xff]
        %v455 = vld [vmem:[#allocation5 + $0x2c0] sm:$0xff]
        %v456 = vld [vmem:[#allocation5 + $0x2c8] sm:$0xff]
        %v457 = vld [vmem:[#allocation5 + $0x2d0] sm:$0xff]
        %v458 = vld [vmem:[#allocation5 + $0x2d8] sm:$0xff]
        %v459 = vld [vmem:[#allocation5 + $0x2e0] sm:$0xff]
        %v460 = vld [vmem:[#allocation5 + $0x2e8] sm:$0xff]
        %v461 = vld [vmem:[#allocation5 + $0x2f0] sm:$0xff]
        %v462 = vld [vmem:[#allocation5 + $0x2f8] sm:$0xff]
        %v463 = vld [vmem:[#allocation5 + $0x300] sm:$0xff]
        %v464 = vld [vmem:[#allocation5 + $0x308] sm:$0xff]
        %v465 = vld [vmem:[#allocation5 + $0x310] sm:$0xff]
        %v466 = vld [vmem:[#allocation5 + $0x318] sm:$0xff]
        %v467 = vld [vmem:[#allocation5 + $0x320] sm:$0xff]
        %v468 = vld [vmem:[#allocation5 + $0x328] sm:$0xff]
        %v469 = vld [vmem:[#allocation5 + $0x330] sm:$0xff]
        %v470 = vld [vmem:[#allocation5 + $0x338] sm:$0xff]
        %v471 = vld [vmem:[#allocation5 + $0x340] sm:$0xff]
        %v472 = vld [vmem:[#allocation5 + $0x348] sm:$0xff]
        %v473 = vld [vmem:[#allocation5 + $0x350] sm:$0xff]
        %v474 = vld [vmem:[#allocation5 + $0x358] sm:$0xff]
        %v475 = vld [vmem:[#allocation5 + $0x360] sm:$0xff]
        %v476 = vld [vmem:[#allocation5 + $0x368] sm:$0xff]
        %v477 = vld [vmem:[#allocation5 + $0x370] sm:$0xff]
        %v478 = vld [vmem:[#allocation5 + $0x378] sm:$0xff]
        %v479 = vld [vmem:[#allocation5 + $0x380] sm:$0xff]
        %v480 = vld [vmem:[#allocation5 + $0x388] sm:$0xff]
        %v481 = vld [vmem:[#allocation5 + $0x390] sm:$0xff]
        %v482 = vld [vmem:[#allocation5 + $0x398] sm:$0xff]
        %v483 = vld [vmem:[#allocation5 + $0x3a0] sm:$0xff]
        %v484 = vld [vmem:[#allocation5 + $0x3a8] sm:$0xff]
        %v485 = vld [vmem:[#allocation5 + $0x3b0] sm:$0xff]
        %v486 = vld [vmem:[#allocation5 + $0x3b8] sm:$0xff]
        %v487 = vld [vmem:[#allocation5 + $0x3c0] sm:$0xff]
        %v488 = vld [vmem:[#allocation5 + $0x3c8] sm:$0xff]
        %v489 = vld [vmem:[#allocation5 + $0x3d0] sm:$0xff]
        %v490 = vld [vmem:[#allocation5 + $0x3d8] sm:$0xff]
        %v491 = vld [vmem:[#allocation5 + $0x3e0] sm:$0xff]
        %v492 = vld [vmem:[#allocation5 + $0x3e8] sm:$0xff]
        %v493 = vld [vmem:[#allocation5 + $0x3f0] sm:$0xff]
        %v494 = vld [vmem:[#allocation5 + $0x3f8] sm:$0xff]
        %v495 = vpack.c.bf16 %v369, %v367
        %v496 = vpack.c.bf16 %v370, %v368
        %v497 = vpack.c.bf16 %v373, %v371
        %v498 = vpack.c.bf16 %v374, %v372
        %v499 = vpack.c.bf16 %v377, %v375
        %v500 = vpack.c.bf16 %v378, %v376
        %v501 = vpack.c.bf16 %v381, %v379
        %v502 = vpack.c.bf16 %v382, %v380
        %v503 = vpack.c.bf16 %v385, %v383
        %v504 = vpack.c.bf16 %v386, %v384
        %v505 = vpack.c.bf16 %v389, %v387
        %v506 = vpack.c.bf16 %v390, %v388
        %v507 = vpack.c.bf16 %v393, %v391
        %v508 = vpack.c.bf16 %v394, %v392
        %v509 = vpack.c.bf16 %v397, %v395
        %v510 = vpack.c.bf16 %v398, %v396
        %v511 = vpack.c.bf16 %v401, %v399
        %v512 = vpack.c.bf16 %v402, %v400
        %v513 = vpack.c.bf16 %v405, %v403
        %v514 = vpack.c.bf16 %v406, %v404
        %v515 = vpack.c.bf16 %v409, %v407
        %v516 = vpack.c.bf16 %v410, %v408
        %v517 = vpack.c.bf16 %v413, %v411
        %v518 = vpack.c.bf16 %v414, %v412
        %v519 = vpack.c.bf16 %v417, %v415
        %v520 = vpack.c.bf16 %v418, %v416
        %v521 = vpack.c.bf16 %v421, %v419
        %v522 = vpack.c.bf16 %v422, %v420
        %v523 = vpack.c.bf16 %v425, %v423
        %v524 = vpack.c.bf16 %v426, %v424
        %v525 = vpack.c.bf16 %v429, %v427
        %v526 = vpack.c.bf16 %v430, %v428
        %v527 = vpack.c.bf16 %v433, %v431
        %v528 = vpack.c.bf16 %v434, %v432
        %v529 = vpack.c.bf16 %v437, %v435
        %v530 = vpack.c.bf16 %v438, %v436
        %v531 = vpack.c.bf16 %v441, %v439
        %v532 = vpack.c.bf16 %v442, %v440
        %v533 = vpack.c.bf16 %v445, %v443
        %v534 = vpack.c.bf16 %v446, %v444
        %v535 = vpack.c.bf16 %v449, %v447
        %v536 = vpack.c.bf16 %v450, %v448
        %v537 = vpack.c.bf16 %v453, %v451
        %v538 = vpack.c.bf16 %v454, %v452
        %v539 = vpack.c.bf16 %v457, %v455
        %v540 = vpack.c.bf16 %v458, %v456
        %v541 = vpack.c.bf16 %v461, %v459
        %v542 = vpack.c.bf16 %v462, %v460
        %v543 = vpack.c.bf16 %v465, %v463
        %v544 = vpack.c.bf16 %v466, %v464
        %v545 = vpack.c.bf16 %v469, %v467
        %v546 = vpack.c.bf16 %v470, %v468
        %v547 = vpack.c.bf16 %v473, %v471
        %v548 = vpack.c.bf16 %v474, %v472
        %v549 = vpack.c.bf16 %v477, %v475
        %v550 = vpack.c.bf16 %v478, %v476
        %v551 = vpack.c.bf16 %v481, %v479
        %v552 = vpack.c.bf16 %v482, %v480
        %v553 = vpack.c.bf16 %v485, %v483
        %v554 = vpack.c.bf16 %v486, %v484
        %v555 = vpack.c.bf16 %v489, %v487
        %v556 = vpack.c.bf16 %v490, %v488
        %v557 = vpack.c.bf16 %v493, %v491
        %v558 = vpack.c.bf16 %v494, %v492
        %v559 = vld [vmem:[%s2] sm:$0x3]
        %v561 = vlaneseq
        %v562 = vshrl.u32 %v561, 7
        %v563 = vsub.s32 0, %v562
        %v564 = vrot.slane %v559, %v563
        %v565 = vlaneseq
        %v566 = vshrl.u32 %v565, 7
        %v567 = vsub.s32 1, %v566
        %v568 = vrot.slane %v559, %v567
        %571 = vmatprep.subr.bf16.mxu0 %v510
        %572 = vmatpush1.bf16.msra.mxu0 %v509
        %573 = vmatprep.subr.bf16.mxu0 %v508
        %574 = vmatpush1.bf16.msra.mxu0 %v507
        %575 = vmatprep.subr.bf16.mxu0 %v506
        %576 = vmatpush1.bf16.msra.mxu0 %v505
        %577 = vmatprep.subr.bf16.mxu0 %v504
        %578 = vmatpush1.bf16.msra.mxu0 %v503
        %579 = vmatprep.subr.bf16.mxu0 %v502
        %580 = vmatpush1.bf16.msra.mxu0 %v501
        %581 = vmatprep.subr.bf16.mxu0 %v500
        %582 = vmatpush1.bf16.msra.mxu0 %v499
        %583 = vmatprep.subr.bf16.mxu0 %v498
        %584 = vmatpush1.bf16.msra.mxu0 %v497
        %585 = vmatprep.subr.bf16.mxu0 %v496
        %586 = vmatpush1.bf16.msra.mxu0 %v495
        %587 = vmatprep.subr.bf16.mxu0 %v526
        %588 = vmatpush2.bf16.msra.mxu0 %v525
        %589 = vmatprep.subr.bf16.mxu0 %v524
        %590 = vmatpush2.bf16.msra.mxu0 %v523
        %591 = vmatprep.subr.bf16.mxu0 %v522
        %592 = vmatpush2.bf16.msra.mxu0 %v521
        %593 = vmatprep.subr.bf16.mxu0 %v520
        %594 = vmatpush2.bf16.msra.mxu0 %v519
        %595 = vmatprep.subr.bf16.mxu0 %v518
        %596 = vmatpush2.bf16.msra.mxu0 %v517
        %597 = vmatprep.subr.bf16.mxu0 %v516
        %598 = vmatpush2.bf16.msra.mxu0 %v515
        %599 = vmatprep.subr.bf16.mxu0 %v514
        %600 = vmatpush2.bf16.msra.mxu0 %v513
        %601 = vmatprep.subr.bf16.mxu0 %v512
        %602 = vmatpush2.bf16.msra.mxu0 %v511
        %603 = vmatprep.mubr.bf16.mxu0 %v336
        %604 = vmatmul.mubr.bf16.gmra.mxu0 %v335
        %v605 = vpop.f32.mrf.mxu0
        %v606 = vadd.f32 %v564, %v605
        %v607 = vpop.f32.mrf.mxu0
        %v608 = vadd.f32 %v568, %v607
        %v609 = vpop.f32.mrf.mxu0
        %v610 = vadd.f32 %v564, %v609
        %v611 = vpop.f32.mrf.mxu0
        %v612 = vadd.f32 %v568, %v611
        %613 = vmatprep.mubr.bf16.mxu0 %v340
        %614 = vmatmul.mubr.bf16.gmra.mxu0 %v339
        %v615 = vpop.f32.mrf.mxu0
        %v616 = vadd.f32 %v564, %v615
        %v617 = vpop.f32.mrf.mxu0
        %v618 = vadd.f32 %v568, %v617
        %v619 = vpop.f32.mrf.mxu0
        %v620 = vadd.f32 %v564, %v619
        %v621 = vpop.f32.mrf.mxu0
        %v622 = vadd.f32 %v568, %v621
        %623 = vmatprep.mubr.bf16.mxu0 %v344
        %624 = vmatmul.mubr.bf16.gmra.mxu0 %v343
        %v625 = vpop.f32.mrf.mxu0
        %v626 = vadd.f32 %v564, %v625
        %v627 = vpop.f32.mrf.mxu0
        %v628 = vadd.f32 %v568, %v627
        %v629 = vpop.f32.mrf.mxu0
        %v630 = vadd.f32 %v564, %v629
        %v631 = vpop.f32.mrf.mxu0
        %v632 = vadd.f32 %v568, %v631
        %633 = vmatprep.mubr.bf16.mxu0 %v348
        %634 = vmatmul.mubr.bf16.gmra.mxu0 %v347
        %v635 = vpop.f32.mrf.mxu0
        %v636 = vadd.f32 %v564, %v635
        %v637 = vpop.f32.mrf.mxu0
        %v638 = vadd.f32 %v568, %v637
        %v639 = vpop.f32.mrf.mxu0
        %v640 = vadd.f32 %v564, %v639
        %v641 = vpop.f32.mrf.mxu0
        %v642 = vadd.f32 %v568, %v641
        %643 = vmatprep.mubr.bf16.mxu0 %v352
        %644 = vmatmul.mubr.bf16.gmra.mxu0 %v351
        %v645 = vpop.f32.mrf.mxu0
        %v646 = vadd.f32 %v564, %v645
        %v647 = vpop.f32.mrf.mxu0
        %v648 = vadd.f32 %v568, %v647
        %v649 = vpop.f32.mrf.mxu0
        %v650 = vadd.f32 %v564, %v649
        %v651 = vpop.f32.mrf.mxu0
        %v652 = vadd.f32 %v568, %v651
        %653 = vmatprep.mubr.bf16.mxu0 %v356
        %654 = vmatmul.mubr.bf16.gmra.mxu0 %v355
        %v655 = vpop.f32.mrf.mxu0
        %v656 = vadd.f32 %v564, %v655
        %v657 = vpop.f32.mrf.mxu0
        %v658 = vadd.f32 %v568, %v657
        %v659 = vpop.f32.mrf.mxu0
        %v660 = vadd.f32 %v564, %v659
        %v661 = vpop.f32.mrf.mxu0
        %v662 = vadd.f32 %v568, %v661
        %663 = vmatprep.mubr.bf16.mxu0 %v360
        %664 = vmatmul.mubr.bf16.gmra.mxu0 %v359
        %v665 = vpop.f32.mrf.mxu0
        %v666 = vadd.f32 %v564, %v665
        %v667 = vpop.f32.mrf.mxu0
        %v668 = vadd.f32 %v568, %v667
        %v669 = vpop.f32.mrf.mxu0
        %v670 = vadd.f32 %v564, %v669
        %v671 = vpop.f32.mrf.mxu0
        %v672 = vadd.f32 %v568, %v671
        %673 = vmatprep.mubr.bf16.mxu0 %v364
        %674 = vmatmul.mubr.bf16.gmra.mxu0 %v363
        %v675 = vpop.f32.mrf.mxu0
        %v676 = vadd.f32 %v564, %v675
        %v677 = vpop.f32.mrf.mxu0
        %v678 = vadd.f32 %v568, %v677
        %v679 = vpop.f32.mrf.mxu0
        %v680 = vadd.f32 %v564, %v679
        %v681 = vpop.f32.mrf.mxu0
        %v682 = vadd.f32 %v568, %v681
        %683 = vdwg.mxu0
        %684 = vmatprep.subr.bf16.mxu0 %v542
        %685 = vmatpush1.bf16.msra.mxu0 %v541
        %686 = vmatprep.subr.bf16.mxu0 %v540
        %687 = vmatpush1.bf16.msra.mxu0 %v539
        %688 = vmatprep.subr.bf16.mxu0 %v538
        %689 = vmatpush1.bf16.msra.mxu0 %v537
        %690 = vmatprep.subr.bf16.mxu0 %v536
        %691 = vmatpush1.bf16.msra.mxu0 %v535
        %692 = vmatprep.subr.bf16.mxu0 %v534
        %693 = vmatpush1.bf16.msra.mxu0 %v533
        %694 = vmatprep.subr.bf16.mxu0 %v532
        %695 = vmatpush1.bf16.msra.mxu0 %v531
        %696 = vmatprep.subr.bf16.mxu0 %v530
        %697 = vmatpush1.bf16.msra.mxu0 %v529
        %698 = vmatprep.subr.bf16.mxu0 %v528
        %699 = vmatpush1.bf16.msra.mxu0 %v527
        %700 = vmatprep.subr.bf16.mxu0 %v558
        %701 = vmatpush2.bf16.msra.mxu0 %v557
        %702 = vmatprep.subr.bf16.mxu0 %v556
        %703 = vmatpush2.bf16.msra.mxu0 %v555
        %704 = vmatprep.subr.bf16.mxu0 %v554
        %705 = vmatpush2.bf16.msra.mxu0 %v553
        %706 = vmatprep.subr.bf16.mxu0 %v552
        %707 = vmatpush2.bf16.msra.mxu0 %v551
        %708 = vmatprep.subr.bf16.mxu0 %v550
        %709 = vmatpush2.bf16.msra.mxu0 %v549
        %710 = vmatprep.subr.bf16.mxu0 %v548
        %711 = vmatpush2.bf16.msra.mxu0 %v547
        %712 = vmatprep.subr.bf16.mxu0 %v546
        %713 = vmatpush2.bf16.msra.mxu0 %v545
        %714 = vmatprep.subr.bf16.mxu0 %v544
        %715 = vmatpush2.bf16.msra.mxu0 %v543
        %716 = vmatprep.mubr.bf16.mxu0 %v338
        %717 = vmatmul.mubr.bf16.gmra.mxu0 %v337
        %v718 = vpop.f32.mrf.mxu0
        %v719 = vadd.f32 %v606, %v718
        %v720 = vpop.f32.mrf.mxu0
        %v721 = vadd.f32 %v608, %v720
        %v722 = vpop.f32.mrf.mxu0
        %v723 = vadd.f32 %v610, %v722
        %v724 = vpop.f32.mrf.mxu0
        %v725 = vadd.f32 %v612, %v724
        %726 = vmatprep.mubr.bf16.mxu0 %v342
        %727 = vmatmul.mubr.bf16.gmra.mxu0 %v341
        %v728 = vpop.f32.mrf.mxu0
        %v729 = vadd.f32 %v616, %v728
        %v730 = vpop.f32.mrf.mxu0
        %v731 = vadd.f32 %v618, %v730
        %v732 = vpop.f32.mrf.mxu0
        %v733 = vadd.f32 %v620, %v732
        %v734 = vpop.f32.mrf.mxu0
        %v735 = vadd.f32 %v622, %v734
        %736 = vmatprep.mubr.bf16.mxu0 %v346
        %737 = vmatmul.mubr.bf16.gmra.mxu0 %v345
        %v738 = vpop.f32.mrf.mxu0
        %v739 = vadd.f32 %v626, %v738
        %v740 = vpop.f32.mrf.mxu0
        %v741 = vadd.f32 %v628, %v740
        %v742 = vpop.f32.mrf.mxu0
        %v743 = vadd.f32 %v630, %v742
        %v744 = vpop.f32.mrf.mxu0
        %v745 = vadd.f32 %v632, %v744
        %746 = vmatprep.mubr.bf16.mxu0 %v350
        %747 = vmatmul.mubr.bf16.gmra.mxu0 %v349
        %v748 = vpop.f32.mrf.mxu0
        %v749 = vadd.f32 %v636, %v748
        %v750 = vpop.f32.mrf.mxu0
        %v751 = vadd.f32 %v638, %v750
        %v752 = vpop.f32.mrf.mxu0
        %v753 = vadd.f32 %v640, %v752
        %v754 = vpop.f32.mrf.mxu0
        %v755 = vadd.f32 %v642, %v754
        %756 = vmatprep.mubr.bf16.mxu0 %v354
        %757 = vmatmul.mubr.bf16.gmra.mxu0 %v353
        %v758 = vpop.f32.mrf.mxu0
        %v759 = vadd.f32 %v646, %v758
        %v760 = vpop.f32.mrf.mxu0
        %v761 = vadd.f32 %v648, %v760
        %v762 = vpop.f32.mrf.mxu0
        %v763 = vadd.f32 %v650, %v762
        %v764 = vpop.f32.mrf.mxu0
        %v765 = vadd.f32 %v652, %v764
        %766 = vmatprep.mubr.bf16.mxu0 %v358
        %767 = vmatmul.mubr.bf16.gmra.mxu0 %v357
        %v768 = vpop.f32.mrf.mxu0
        %v769 = vadd.f32 %v656, %v768
        %v770 = vpop.f32.mrf.mxu0
        %v771 = vadd.f32 %v658, %v770
        %v772 = vpop.f32.mrf.mxu0
        %v773 = vadd.f32 %v660, %v772
        %v774 = vpop.f32.mrf.mxu0
        %v775 = vadd.f32 %v662, %v774
        %776 = vmatprep.mubr.bf16.mxu0 %v362
        %777 = vmatmul.mubr.bf16.gmra.mxu0 %v361
        %v778 = vpop.f32.mrf.mxu0
        %v779 = vadd.f32 %v666, %v778
        %v780 = vpop.f32.mrf.mxu0
        %v781 = vadd.f32 %v668, %v780
        %v782 = vpop.f32.mrf.mxu0
        %v783 = vadd.f32 %v670, %v782
        %v784 = vpop.f32.mrf.mxu0
        %v785 = vadd.f32 %v672, %v784
        %786 = vmatprep.mubr.bf16.mxu0 %v366
        %787 = vmatmul.mubr.bf16.gmra.mxu0 %v365
        %v788 = vpop.f32.mrf.mxu0
        %v789 = vadd.f32 %v676, %v788
        %v790 = vpop.f32.mrf.mxu0
        %v791 = vadd.f32 %v678, %v790
        %v792 = vpop.f32.mrf.mxu0
        %v793 = vadd.f32 %v680, %v792
        %v794 = vpop.f32.mrf.mxu0
        %v795 = vadd.f32 %v682, %v794
        %796 = vdwg.mxu0
        %v797 = vmul.f32 %v719, %v719
        %v798 = vmul.f32 %v721, %v721
        %v799 = vmul.f32 %v723, %v723
        %v800 = vmul.f32 %v725, %v725
        %v801 = vmul.f32 %v729, %v729
        %v802 = vmul.f32 %v731, %v731
        %v803 = vmul.f32 %v733, %v733
        %v804 = vmul.f32 %v735, %v735
        %v805 = vmul.f32 %v739, %v739
        %v806 = vmul.f32 %v741, %v741
        %v807 = vmul.f32 %v743, %v743
        %v808 = vmul.f32 %v745, %v745
        %v809 = vmul.f32 %v749, %v749
        %v810 = vmul.f32 %v751, %v751
        %v811 = vmul.f32 %v753, %v753
        %v812 = vmul.f32 %v755, %v755
        %v813 = vmul.f32 %v759, %v759
        %v814 = vmul.f32 %v761, %v761
        %v815 = vmul.f32 %v763, %v763
        %v816 = vmul.f32 %v765, %v765
        %v817 = vmul.f32 %v769, %v769
        %v818 = vmul.f32 %v771, %v771
        %v819 = vmul.f32 %v773, %v773
        %v820 = vmul.f32 %v775, %v775
        %v821 = vmul.f32 %v779, %v779
        %v822 = vmul.f32 %v781, %v781
        %v823 = vmul.f32 %v783, %v783
        %v824 = vmul.f32 %v785, %v785
        %v825 = vmul.f32 %v789, %v789
        %v826 = vmul.f32 %v791, %v791
        %v827 = vmul.f32 %v793, %v793
        %v828 = vmul.f32 %v795, %v795
        %v829 = vadd.f32 %v797, %v798
        %830 = vadd.xlane.f32.xlu0 %v829
        %v831 = vpop.xlane.xlu0 %830
        %v832 = vadd.f32 %v799, %v800
        %833 = vadd.xlane.f32.xlu0 %v832
        %v834 = vpop.xlane.xlu0 %833
        %v835 = vadd.f32 %v801, %v802
        %836 = vadd.xlane.f32.xlu0 %v835
        %v837 = vpop.xlane.xlu0 %836
        %v838 = vadd.f32 %v803, %v804
        %839 = vadd.xlane.f32.xlu0 %v838
        %v840 = vpop.xlane.xlu0 %839
        %v841 = vadd.f32 %v805, %v806
        %842 = vadd.xlane.f32.xlu0 %v841
        %v843 = vpop.xlane.xlu0 %842
        %v844 = vadd.f32 %v807, %v808
        %845 = vadd.xlane.f32.xlu0 %v844
        %v846 = vpop.xlane.xlu0 %845
        %v847 = vadd.f32 %v809, %v810
        %848 = vadd.xlane.f32.xlu0 %v847
        %v849 = vpop.xlane.xlu0 %848
        %v850 = vadd.f32 %v811, %v812
        %851 = vadd.xlane.f32.xlu0 %v850
        %v852 = vpop.xlane.xlu0 %851
        %v853 = vadd.f32 %v813, %v814
        %854 = vadd.xlane.f32.xlu0 %v853
        %v855 = vpop.xlane.xlu0 %854
        %v856 = vadd.f32 %v815, %v816
        %857 = vadd.xlane.f32.xlu0 %v856
        %v858 = vpop.xlane.xlu0 %857
        %v859 = vadd.f32 %v817, %v818
        %860 = vadd.xlane.f32.xlu0 %v859
        %v861 = vpop.xlane.xlu0 %860
        %v862 = vadd.f32 %v819, %v820
        %863 = vadd.xlane.f32.xlu0 %v862
        %v864 = vpop.xlane.xlu0 %863
        %v865 = vadd.f32 %v821, %v822
        %866 = vadd.xlane.f32.xlu0 %v865
        %v867 = vpop.xlane.xlu0 %866
        %v868 = vadd.f32 %v823, %v824
        %869 = vadd.xlane.f32.xlu0 %v868
        %v870 = vpop.xlane.xlu0 %869
        %v871 = vadd.f32 %v825, %v826
        %872 = vadd.xlane.f32.xlu0 %v871
        %v873 = vpop.xlane.xlu0 %872
        %v874 = vadd.f32 %v827, %v828
        %875 = vadd.xlane.f32.xlu0 %v874
        %v876 = vpop.xlane.xlu0 %875
        %v877 = vrsqrt.pop %v831
        %v878 = vrsqrt.pop %v834
        %v879 = vrsqrt.pop %v837
        %v880 = vrsqrt.pop %v840
        %v881 = vrsqrt.pop %v843
        %v882 = vrsqrt.pop %v846
        %v883 = vrsqrt.pop %v849
        %v884 = vrsqrt.pop %v852
        %v885 = vrsqrt.pop %v855
        %v886 = vrsqrt.pop %v858
        %v887 = vrsqrt.pop %v861
        %v888 = vrsqrt.pop %v864
        %v889 = vrsqrt.pop %v867
        %v890 = vrsqrt.pop %v870
        %v891 = vrsqrt.pop %v873
        %v892 = vrsqrt.pop %v876
        %v893 = vmul.f32 %v719, %v877
        %v894 = vmul.f32 %v721, %v877
        %v895 = vmul.f32 %v723, %v878
        %v896 = vmul.f32 %v725, %v878
        %v897 = vmul.f32 %v729, %v879
        %v898 = vmul.f32 %v731, %v879
        %v899 = vmul.f32 %v733, %v880
        %v900 = vmul.f32 %v735, %v880
        %v901 = vmul.f32 %v739, %v881
        %v902 = vmul.f32 %v741, %v881
        %v903 = vmul.f32 %v743, %v882
        %v904 = vmul.f32 %v745, %v882
        %v905 = vmul.f32 %v749, %v883
        %v906 = vmul.f32 %v751, %v883
        %v907 = vmul.f32 %v753, %v884
        %v908 = vmul.f32 %v755, %v884
        %v909 = vmul.f32 %v759, %v885
        %v910 = vmul.f32 %v761, %v885
        %v911 = vmul.f32 %v763, %v886
        %v912 = vmul.f32 %v765, %v886
        %v913 = vmul.f32 %v769, %v887
        %v914 = vmul.f32 %v771, %v887
        %v915 = vmul.f32 %v773, %v888
        %v916 = vmul.f32 %v775, %v888
        %v917 = vmul.f32 %v779, %v889
        %v918 = vmul.f32 %v781, %v889
        %v919 = vmul.f32 %v783, %v890
        %v920 = vmul.f32 %v785, %v890
        %v921 = vmul.f32 %v789, %v891
        %v922 = vmul.f32 %v791, %v891
        %v923 = vmul.f32 %v793, %v892
        %v924 = vmul.f32 %v795, %v892
        %925 = vst [vmem:[%s204] sm:$0xff] %v893
        %926 = vst [vmem:[%s204 + $0x8] sm:$0xff] %v894
        %927 = vst [vmem:[%s204 + $0x10] sm:$0xff] %v895
        %928 = vst [vmem:[%s204 + $0x18] sm:$0xff] %v896
        %929 = vst [vmem:[%s204 + $0x20] sm:$0xff] %v897
        %930 = vst [vmem:[%s204 + $0x28] sm:$0xff] %v898
        %931 = vst [vmem:[%s204 + $0x30] sm:$0xff] %v899
        %932 = vst [vmem:[%s204 + $0x38] sm:$0xff] %v900
        %933 = vst [vmem:[%s204 + $0x40] sm:$0xff] %v901
        %934 = vst [vmem:[%s204 + $0x48] sm:$0xff] %v902
        %935 = vst [vmem:[%s204 + $0x50] sm:$0xff] %v903
        %936 = vst [vmem:[%s204 + $0x58] sm:$0xff] %v904
        %937 = vst [vmem:[%s204 + $0x60] sm:$0xff] %v905
        %938 = vst [vmem:[%s204 + $0x68] sm:$0xff] %v906
        %939 = vst [vmem:[%s204 + $0x70] sm:$0xff] %v907
        %940 = vst [vmem:[%s204 + $0x78] sm:$0xff] %v908
        %941 = vst [vmem:[%s204 + $0x80] sm:$0xff] %v909
        %942 = vst [vmem:[%s204 + $0x88] sm:$0xff] %v910
        %943 = vst [vmem:[%s204 + $0x90] sm:$0xff] %v911
        %944 = vst [vmem:[%s204 + $0x98] sm:$0xff] %v912
        %945 = vst [vmem:[%s204 + $0xa0] sm:$0xff] %v913
        %946 = vst [vmem:[%s204 + $0xa8] sm:$0xff] %v914
        %947 = vst [vmem:[%s204 + $0xb0] sm:$0xff] %v915
        %948 = vst [vmem:[%s204 + $0xb8] sm:$0xff] %v916
        %949 = vst [vmem:[%s204 + $0xc0] sm:$0xff] %v917
        %950 = vst [vmem:[%s204 + $0xc8] sm:$0xff] %v918
        %951 = vst [vmem:[%s204 + $0xd0] sm:$0xff] %v919
        %952 = vst [vmem:[%s204 + $0xd8] sm:$0xff] %v920
        %953 = vst [vmem:[%s204 + $0xe0] sm:$0xff] %v921
        %954 = vst [vmem:[%s204 + $0xe8] sm:$0xff] %v922
        %955 = vst [vmem:[%s204 + $0xf0] sm:$0xff] %v923
        %956 = vst [vmem:[%s204 + $0xf8] sm:$0xff] %v924
        %s957 = sand.u32 %s97, 1
        %s958 = scalar_lea.sflag [#allocation4], %s957
        %s959 = sand.u32 %s97, 1
        %s960 = smul.addr %s959, 256
        %s961 = scalar_lea.vmem [#allocation7], %s960
        // Predicated region
        $region41: #{tpu_custom_call.1} parent=31 // pred_check
          %p962 = pneg %p107
        $region42: #{tpu_custom_call.1} parent=31 // pred_check_branch
          %964 = sbr.rel (%p962) target = $region44
        $region43: #{tpu_custom_call.1} parent=31 // pred_region
          %s965 = smul.u32 16, %s21
          %s967 = ssub.s32 4096, 4096
          %968 = vsyncadd %s958, %s967
          %s969 = smul.addr %s965, 2
          %s970 = smul.addr %s969, 128
          %s971 = scalar_lea.hbm %s3, %s970
          %s972 = sshll.u32 %s961, 4
          %s973 = int_to_ptr.vmem [resolvable:$true] %s972
          %978 = dma.vmem_to_hbm [thread:$0]  %s973, 4096, %s971, %s958, 256, 256, 16
        $region44: #{tpu_custom_call.1} parent=31 // pred_fallthru
          _
      $region32: #{tpu_custom_call.1} parent=5 // pred_fallthru
        _
      %p979 = scmp.le.s32.totalorder 2, %s16
      // Predicated region
      $region45: #{tpu_custom_call.1} parent=5 // pred_check
        %p980 = pneg %p979
      $region46: #{tpu_custom_call.1} parent=5 // pred_check_branch
        %982 = sbr.rel (%p980) target = $region48
      $region47: #{tpu_custom_call.1} parent=5 // pred_region
        %s983 = ssub.s32 %s16, 2
        // Predicated region
        $region49: #{tpu_custom_call.1} parent=47 // pred_check
          %p984 = pneg %p113
        $region50: #{tpu_custom_call.1} parent=47 // pred_check_branch
          %986 = sbr.rel (%p984) target = $region52
        $region51: #{tpu_custom_call.1} parent=47 // pred_region
          %s987 = sand.u32 %s98, 1
          %s988 = scalar_lea.sflag [#allocation4], %s987
          %s989 = sand.u32 %s98, 1
          %s990 = smul.addr %s989, 256
          %s991 = scalar_lea.vmem [#allocation7], %s990
          %992 = dma.done %s988, 4096
        $region52: #{tpu_custom_call.1} parent=47 // pred_fallthru
          _
      $region48: #{tpu_custom_call.1} parent=5 // pred_fallthru
        _
    $region6: #{tpu_custom_call.1} parent=1 // loop_footer
      %s20 = sadd.s32 1, %s16
    $region7: #{tpu_custom_call.1} parent=1 // loop_footer_branch
      %15 = sbr.rel target = $region3
    $region8: #{tpu_custom_call.1} parent=1 // loop_exit
      _
    %993 = vsyncpa [#allocation3], 1
    %s994 = scalar_lea.sflag [#allocation3], 1
    %995 = vsyncpa %s994, 1
    %996 = vsyncpa [#allocation6], 1
    %997 = vsyncpa [#allocation4], 1
    %s998 = scalar_lea.sflag [#allocation4], 1
    %999 = vsyncpa %s998, 1

</llo_original>
